<compile_context>
chip_gen: v6e
topology: v6e:2x2x1
jax: 0.10.0
libtpu: 0.0.40
codegen_flags: <defaults>
</compile_context>

<pallas_src>
import jax
import jax.numpy as jnp
from jax.experimental import pallas as pl
from jax.experimental.pallas import tpu as pltpu

MANO_BETA_NUM = 10


def _round_up(n, m):
    return ((n + m - 1) // m) * m


def _mlp_kernel(x_ref, w1_ref, b1_ref, w2_ref, b2_ref,
                w3_ref, b3_ref, w4_ref, b4_ref, out_ref):
    # Whole 4-layer MLP fused per batch tile.  Weights arrive as bf16; the
    # activations are cast to bf16 right before each MXU dot, accumulation and
    # bias/activation math stay in f32.
    h = x_ref[...].astype(jnp.bfloat16)

    h = jnp.dot(h, w1_ref[...], preferred_element_type=jnp.float32) + b1_ref[...]
    h = jnp.maximum(h, 0.0).astype(jnp.bfloat16)            # ReLU

    h = jnp.dot(h, w2_ref[...], preferred_element_type=jnp.float32) + b2_ref[...]
    h = jnp.maximum(h, 0.0).astype(jnp.bfloat16)            # ReLU

    h = jnp.dot(h, w3_ref[...], preferred_element_type=jnp.float32) + b3_ref[...]
    h = jnp.maximum(h, 0.0).astype(jnp.bfloat16)            # ReLU

    h = jnp.dot(h, w4_ref[...], preferred_element_type=jnp.float32) + b4_ref[...]
    # sigmoid(h) - 0.5 == 0.5 * tanh(h / 2): single EUP op, no divide.
    out_ref[...] = 0.5 * jnp.tanh(0.5 * h)


def mano_betas_prediction(x, params, *, tile_b=256):
    """x: [B, input_dim] float32; params: list of 4 (W [in,out], b [1,out]) pairs."""
    B, input_dim = x.shape
    (w1, b1), (w2, b2), (w3, b3), (w4, b4) = params

    # Weights feed the MXU in bf16 (halves weight DMA bytes; f32 accumulate).
    w1, w2, w3, w4 = (w.astype(jnp.bfloat16) for w in (w1, w2, w3, w4))

    # Batch tiling: keep the tile sublane-aligned (multiple of 8) and clamp it
    # so tiny batches don't pad excessively; pad B so the last tile is full
    # (padded rows are zeros and are sliced off before returning).
    tile_b = max(8, min(tile_b, _round_up(B, 8)))
    tile_b = _round_up(tile_b, 8)
    B_pad = _round_up(B, tile_b)
    if B_pad != B:
        x = jnp.pad(x, ((0, B_pad - B), (0, 0)))

    # Constant index_map => block unchanged across grid steps => stays in VMEM.
    const_spec = lambda a: pl.BlockSpec(a.shape, lambda i: (0, 0))
    weight_args = (w1, b1, w2, b2, w3, b3, w4, b4)

    out = pl.pallas_call(
        _mlp_kernel,
        out_shape=jax.ShapeDtypeStruct((B_pad, MANO_BETA_NUM), jnp.float32),
        grid_spec=pltpu.PrefetchScalarGridSpec(
            num_scalar_prefetch=0,
            grid=(B_pad // tile_b,),
            in_specs=[pl.BlockSpec((tile_b, input_dim), lambda i: (i, 0))]
                     + [const_spec(a) for a in weight_args],
            out_specs=pl.BlockSpec((tile_b, MANO_BETA_NUM), lambda i: (i, 0)),
        ),
        compiler_params=pltpu.CompilerParams(
            dimension_semantics=("parallel",)),   # megacore split on v7x
    )(x, *weight_args)

    return out[:B]


def init_params(key, input_dim, output_dim):
    """Deterministic init of 4 Linear layers: input_dim -> d/2 -> d/4 -> d/8 -> output_dim."""
    dims = [input_dim, input_dim // 2, input_dim // 4, input_dim // 8, output_dim]
    params = []
    for i in range(4):
        key, kw, kb = jax.random.split(key, 3)
        fan_in = dims[i]
        bound = 1.0 / jnp.sqrt(fan_in)          # PyTorch Linear default init range
        w = jax.random.uniform(kw, (dims[i], dims[i + 1]), jnp.float32, -bound, bound)
        b = jax.random.uniform(kb, (1, dims[i + 1]), jnp.float32, -bound, bound)
        params.append((w, b))
    return params


def reference(x, params):
    """Pure-JAX f32 reference of the assumed module."""
    h = x
    for i, (w, b) in enumerate(params):
        h = h @ w + b
        h = jnp.maximum(h, 0.0) if i < 3 else jax.nn.sigmoid(h)
    return h - 0.5


if __name__ == "__main__":
    key = jax.random.PRNGKey(0)
    INPUT_DIM = 128

    # --- check 1: small batch, single tile ---------------------------------
    B = 8
    kx, kp, kx2 = jax.random.split(key, 3)
    x = jax.random.normal(kx, (B, INPUT_DIM), jnp.float32)
    params = init_params(kp, INPUT_DIM, MANO_BETA_NUM)

    out = jax.block_until_ready(mano_betas_prediction(x, params))
    ref = reference(x, params)
    assert out.shape == (B, MANO_BETA_NUM)
    # bf16 MXU operands vs f32 reference: allow a small tolerance.
    assert jnp.max(jnp.abs(out - ref)) < 1e-2, "mismatch vs. pure-JAX reference (B=8)"

    # --- check 2: ragged batch, multiple grid tiles (exercises padding) -----
    B2 = 20
    x2 = jax.random.normal(kx2, (B2, INPUT_DIM), jnp.float32)
    out2 = jax.block_until_ready(mano_betas_prediction(x2, params, tile_b=8))
    ref2 = reference(x2, params)
    assert out2.shape == (B2, MANO_BETA_NUM)
    assert jnp.max(jnp.abs(out2 - ref2)) < 1e-2, "mismatch vs. pure-JAX reference (B=20)"

    print("KERNEL_OK")
</pallas_src>

<mosaic_0001>
module attributes {stable_mosaic.version = 11 : i64} {
  func.func @_mlp_kernel(%arg0: i32, %arg1: memref<8x128xf32, #tpu.memory_space<vmem>>, %arg2: memref<128x64xbf16, #tpu.memory_space<vmem>>, %arg3: memref<1x64xf32, #tpu.memory_space<vmem>>, %arg4: memref<64x32xbf16, #tpu.memory_space<vmem>>, %arg5: memref<1x32xf32, #tpu.memory_space<vmem>>, %arg6: memref<32x16xbf16, #tpu.memory_space<vmem>>, %arg7: memref<1x16xf32, #tpu.memory_space<vmem>>, %arg8: memref<16x10xbf16, #tpu.memory_space<vmem>>, %arg9: memref<1x10xf32, #tpu.memory_space<vmem>>, %arg10: memref<8x10xf32, #tpu.memory_space<vmem>>) attributes {dimension_semantics = [#tpu.dimension_semantics<parallel>], iteration_bounds = array<i64: 1>, scalar_prefetch = 0 : i64, scratch_operands = 0 : i64, tpu.core_type = #tpu.core_type<tc>, window_params = [{transform_indices = @transform_0, window_bounds = array<i64: 8, 128>}, {pipeline_mode = #tpu.pipeline_mode<synchronous>, transform_indices = @transform_1, window_bounds = array<i64: 128, 64>}, {pipeline_mode = #tpu.pipeline_mode<synchronous>, transform_indices = @transform_2, window_bounds = array<i64: 1, 64>}, {pipeline_mode = #tpu.pipeline_mode<synchronous>, transform_indices = @transform_3, window_bounds = array<i64: 64, 32>}, {pipeline_mode = #tpu.pipeline_mode<synchronous>, transform_indices = @transform_4, window_bounds = array<i64: 1, 32>}, {pipeline_mode = #tpu.pipeline_mode<synchronous>, transform_indices = @transform_5, window_bounds = array<i64: 32, 16>}, {pipeline_mode = #tpu.pipeline_mode<synchronous>, transform_indices = @transform_6, window_bounds = array<i64: 1, 16>}, {pipeline_mode = #tpu.pipeline_mode<synchronous>, transform_indices = @transform_7, window_bounds = array<i64: 16, 10>}, {pipeline_mode = #tpu.pipeline_mode<synchronous>, transform_indices = @transform_8, window_bounds = array<i64: 1, 10>}, {transform_indices = @transform_9, window_bounds = array<i64: 8, 10>}]} {
    %c0 = arith.constant 0 : index
    %c0_0 = arith.constant 0 : index
    %0 = vector.load %arg1[%c0, %c0_0] : memref<8x128xf32, #tpu.memory_space<vmem>>, vector<8x128xf32>
    %1 = arith.truncf %0 : vector<8x128xf32> to vector<8x128xbf16>
    %c0_1 = arith.constant 0 : index
    %c0_2 = arith.constant 0 : index
    %2 = vector.load %arg2[%c0_1, %c0_2] : memref<128x64xbf16, #tpu.memory_space<vmem>>, vector<128x64xbf16>
    %cst = arith.constant dense<0.000000e+00> : vector<8x64xf32>
    %3 = tpu.matmul %1, %2, %cst {dimension_numbers = #tpu.dot_dimension_numbers<[1], [0], [0], [1], [0, 0, 1, 1], [], []>} : vector<8x128xbf16>, vector<128x64xbf16>, vector<8x64xf32> -> vector<8x64xf32>
    %c0_3 = arith.constant 0 : index
    %c0_4 = arith.constant 0 : index
    %4 = vector.load %arg3[%c0_3, %c0_4] : memref<1x64xf32, #tpu.memory_space<vmem>>, vector<1x64xf32>
    %5 = vector.broadcast %4 : vector<1x64xf32> to vector<8x64xf32>
    %6 = arith.addf %3, %5 : vector<8x64xf32>
    %cst_5 = arith.constant 0.000000e+00 : f32
    %7 = vector.broadcast %cst_5 : f32 to vector<8x64xf32>
    %8 = arith.maximumf %6, %7 : vector<8x64xf32>
    %9 = arith.truncf %8 : vector<8x64xf32> to vector<8x64xbf16>
    %c0_6 = arith.constant 0 : index
    %c0_7 = arith.constant 0 : index
    %10 = vector.load %arg4[%c0_6, %c0_7] : memref<64x32xbf16, #tpu.memory_space<vmem>>, vector<64x32xbf16>
    %cst_8 = arith.constant dense<0.000000e+00> : vector<8x32xf32>
    %11 = tpu.matmul %9, %10, %cst_8 {dimension_numbers = #tpu.dot_dimension_numbers<[1], [0], [0], [1], [0, 0, 1, 1], [], []>} : vector<8x64xbf16>, vector<64x32xbf16>, vector<8x32xf32> -> vector<8x32xf32>
    %c0_9 = arith.constant 0 : index
    %c0_10 = arith.constant 0 : index
    %12 = vector.load %arg5[%c0_9, %c0_10] : memref<1x32xf32, #tpu.memory_space<vmem>>, vector<1x32xf32>
    %13 = vector.broadcast %12 : vector<1x32xf32> to vector<8x32xf32>
    %14 = arith.addf %11, %13 : vector<8x32xf32>
    %cst_11 = arith.constant 0.000000e+00 : f32
    %15 = vector.broadcast %cst_11 : f32 to vector<8x32xf32>
    %16 = arith.maximumf %14, %15 : vector<8x32xf32>
    %17 = arith.truncf %16 : vector<8x32xf32> to vector<8x32xbf16>
    %c0_12 = arith.constant 0 : index
    %c0_13 = arith.constant 0 : index
    %18 = vector.load %arg6[%c0_12, %c0_13] : memref<32x16xbf16, #tpu.memory_space<vmem>>, vector<32x16xbf16>
    %cst_14 = arith.constant dense<0.000000e+00> : vector<8x16xf32>
    %19 = tpu.matmul %17, %18, %cst_14 {dimension_numbers = #tpu.dot_dimension_numbers<[1], [0], [0], [1], [0, 0, 1, 1], [], []>} : vector<8x32xbf16>, vector<32x16xbf16>, vector<8x16xf32> -> vector<8x16xf32>
    %c0_15 = arith.constant 0 : index
    %c0_16 = arith.constant 0 : index
    %20 = vector.load %arg7[%c0_15, %c0_16] : memref<1x16xf32, #tpu.memory_space<vmem>>, vector<1x16xf32>
    %21 = vector.broadcast %20 : vector<1x16xf32> to vector<8x16xf32>
    %22 = arith.addf %19, %21 : vector<8x16xf32>
    %cst_17 = arith.constant 0.000000e+00 : f32
    %23 = vector.broadcast %cst_17 : f32 to vector<8x16xf32>
    %24 = arith.maximumf %22, %23 : vector<8x16xf32>
    %25 = arith.truncf %24 : vector<8x16xf32> to vector<8x16xbf16>
    %c0_18 = arith.constant 0 : index
    %c0_19 = arith.constant 0 : index
    %26 = vector.load %arg8[%c0_18, %c0_19] : memref<16x10xbf16, #tpu.memory_space<vmem>>, vector<16x10xbf16>
    %cst_20 = arith.constant dense<0.000000e+00> : vector<8x10xf32>
    %27 = tpu.matmul %25, %26, %cst_20 {dimension_numbers = #tpu.dot_dimension_numbers<[1], [0], [0], [1], [0, 0, 1, 1], [], []>} : vector<8x16xbf16>, vector<16x10xbf16>, vector<8x10xf32> -> vector<8x10xf32>
    %c0_21 = arith.constant 0 : index
    %c0_22 = arith.constant 0 : index
    %28 = vector.load %arg9[%c0_21, %c0_22] : memref<1x10xf32, #tpu.memory_space<vmem>>, vector<1x10xf32>
    %29 = vector.broadcast %28 : vector<1x10xf32> to vector<8x10xf32>
    %30 = arith.addf %27, %29 : vector<8x10xf32>
    %cst_23 = arith.constant 5.000000e-01 : f32
    %31 = vector.broadcast %cst_23 : f32 to vector<8x10xf32>
    %32 = arith.mulf %31, %30 : vector<8x10xf32>
    %33 = math.tanh %32 : vector<8x10xf32>
    %cst_24 = arith.constant 5.000000e-01 : f32
    %34 = vector.broadcast %cst_24 : f32 to vector<8x10xf32>
    %35 = arith.mulf %34, %33 : vector<8x10xf32>
    %c0_25 = arith.constant 0 : index
    %c0_26 = arith.constant 0 : index
    %36 = vector.load %arg10[%c0_25, %c0_26] : memref<8x10xf32, #tpu.memory_space<vmem>>, vector<8x10xf32>
    tpu.vector_store %arg10[%c0_25, %c0_26], %35 {strides = array<i32>} : memref<8x10xf32, #tpu.memory_space<vmem>>, vector<8x10xf32>,
    return
  }
  func.func @transform_0(%arg0: i32) -> (i32, i32) {
    %c0_i32 = arith.constant 0 : i32
    %c0_i32_0 = arith.constant 0 : i32
    return %arg0, %c0_i32 : i32, i32
  }
  func.func @transform_1(%arg0: i32) -> (i32, i32) {
    %c0_i32 = arith.constant 0 : i32
    %c0_i32_0 = arith.constant 0 : i32
    %c0_i32_1 = arith.constant 0 : i32
    return %c0_i32, %c0_i32_0 : i32, i32
  }
  func.func @transform_2(%arg0: i32) -> (i32, i32) {
    %c0_i32 = arith.constant 0 : i32
    %c0_i32_0 = arith.constant 0 : i32
    %c0_i32_1 = arith.constant 0 : i32
    return %c0_i32, %c0_i32_0 : i32, i32
  }
  func.func @transform_3(%arg0: i32) -> (i32, i32) {
    %c0_i32 = arith.constant 0 : i32
    %c0_i32_0 = arith.constant 0 : i32
    %c0_i32_1 = arith.constant 0 : i32
    return %c0_i32, %c0_i32_0 : i32, i32
  }
  func.func @transform_4(%arg0: i32) -> (i32, i32) {
    %c0_i32 = arith.constant 0 : i32
    %c0_i32_0 = arith.constant 0 : i32
    %c0_i32_1 = arith.constant 0 : i32
    return %c0_i32, %c0_i32_0 : i32, i32
  }
  func.func @transform_5(%arg0: i32) -> (i32, i32) {
    %c0_i32 = arith.constant 0 : i32
    %c0_i32_0 = arith.constant 0 : i32
    %c0_i32_1 = arith.constant 0 : i32
    return %c0_i32, %c0_i32_0 : i32, i32
  }
  func.func @transform_6(%arg0: i32) -> (i32, i32) {
    %c0_i32 = arith.constant 0 : i32
    %c0_i32_0 = arith.constant 0 : i32
    %c0_i32_1 = arith.constant 0 : i32
    return %c0_i32, %c0_i32_0 : i32, i32
  }
  func.func @transform_7(%arg0: i32) -> (i32, i32) {
    %c0_i32 = arith.constant 0 : i32
    %c0_i32_0 = arith.constant 0 : i32
    %c0_i32_1 = arith.constant 0 : i32
    return %c0_i32, %c0_i32_0 : i32, i32
  }
  func.func @transform_8(%arg0: i32) -> (i32, i32) {
    %c0_i32 = arith.constant 0 : i32
    %c0_i32_0 = arith.constant 0 : i32
    %c0_i32_1 = arith.constant 0 : i32
    return %c0_i32, %c0_i32_0 : i32, i32
  }
  func.func @transform_9(%arg0: i32) -> (i32, i32) {
    %c0_i32 = arith.constant 0 : i32
    %c0_i32_0 = arith.constant 0 : i32
    return %arg0, %c0_i32 : i32, i32
  }
}

</mosaic_0001>

<llo_original>
// kernel: tpu_custom_call.1
$region0: #{tpu_custom_call.1}
  #allocation0 [shape = 'u32[]', space=smem, size = 0x4, offset = 0x4, fixed_abs, tag = 'smem constant byte address 0x4 - core index']
  #allocation1 [shape = 'u32[144,128]{1,0:T(1,128)}', space=vmem, size = 0x12000, scoped, tag = 'internal scratch']
  %s0 = inlined_call_operand.vmem [shape: f32[8,128], index: 0, kind: input, shape index: {}]
  %s1 = inlined_call_operand.vmem [shape: bf16[128,64], index: 1, kind: input, shape index: {}]
  %s2 = inlined_call_operand.vmem [shape: f32[1,64], index: 2, kind: input, shape index: {}]
  %s3 = inlined_call_operand.vmem [shape: bf16[64,32], index: 3, kind: input, shape index: {}]
  %s4 = inlined_call_operand.vmem [shape: f32[1,32], index: 4, kind: input, shape index: {}]
  %s5 = inlined_call_operand.vmem [shape: bf16[32,16], index: 5, kind: input, shape index: {}]
  %s6 = inlined_call_operand.vmem [shape: f32[1,16], index: 6, kind: input, shape index: {}]
  %s7 = inlined_call_operand.vmem [shape: bf16[16,10], index: 7, kind: input, shape index: {}]
  %s8 = inlined_call_operand.vmem [shape: f32[1,10], index: 8, kind: input, shape index: {}]
  %s9 = inlined_call_operand.hbm [shape: f32[8,10], index: 9, kind: output, shape index: {}]
  %s10 = sld [smem:[#allocation0]]
  $region46: #{tpu_custom_call.1} parent=0
    _
  %s12 = ssub.s32 1, %s10
  %s13 = scalar_select 0, %s12, %s10
  $region1: #{tpu_custom_call.1} parent=0
    #allocation2 [shape = 'u8[4096]{0}', space=vmem, size = 0x1000, scoped, tag = 'output window, operand 0, single buffered']
    #allocation3 [shape = 's32[1]{0}', space=sflag, size = 0x4, scoped, tag = 'scoped memory for tpu_custom_call.1']
    %14 = vsyncpa [#allocation3], 0
    // Predicated region
    $region2: #{tpu_custom_call.1} parent=1 // pred_check
      _
    $region3: #{tpu_custom_call.1} parent=1 // pred_check_branch
      %16 = sbr.rel (0) target = $region5
    $region4: #{tpu_custom_call.1} parent=1 // pred_region
      _
    $region5: #{tpu_custom_call.1} parent=1 // pred_fallthru
      _
    // Predicated region
    $region6: #{tpu_custom_call.1} parent=1 // pred_check
      _
    $region7: #{tpu_custom_call.1} parent=1 // pred_check_branch
      %18 = sbr.rel (0) target = $region9
    $region8: #{tpu_custom_call.1} parent=1 // pred_region
      _
    $region9: #{tpu_custom_call.1} parent=1 // pred_fallthru
      _
    // Predicated region
    $region10: #{tpu_custom_call.1} parent=1 // pred_check
      _
    $region11: #{tpu_custom_call.1} parent=1 // pred_check_branch
      %20 = sbr.rel (0) target = $region13
    $region12: #{tpu_custom_call.1} parent=1 // pred_region
      _
    $region13: #{tpu_custom_call.1} parent=1 // pred_fallthru
      _
    // Predicated region
    $region14: #{tpu_custom_call.1} parent=1 // pred_check
      _
    $region15: #{tpu_custom_call.1} parent=1 // pred_check_branch
      %22 = sbr.rel (0) target = $region17
    $region16: #{tpu_custom_call.1} parent=1 // pred_region
      _
    $region17: #{tpu_custom_call.1} parent=1 // pred_fallthru
      _
    // Predicated region
    $region18: #{tpu_custom_call.1} parent=1 // pred_check
      _
    $region19: #{tpu_custom_call.1} parent=1 // pred_check_branch
      %24 = sbr.rel (0) target = $region21
    $region20: #{tpu_custom_call.1} parent=1 // pred_region
      _
    $region21: #{tpu_custom_call.1} parent=1 // pred_fallthru
      _
    // Predicated region
    $region22: #{tpu_custom_call.1} parent=1 // pred_check
      _
    $region23: #{tpu_custom_call.1} parent=1 // pred_check_branch
      %26 = sbr.rel (0) target = $region25
    $region24: #{tpu_custom_call.1} parent=1 // pred_region
      _
    $region25: #{tpu_custom_call.1} parent=1 // pred_fallthru
      _
    // Predicated region
    $region26: #{tpu_custom_call.1} parent=1 // pred_check
      _
    $region27: #{tpu_custom_call.1} parent=1 // pred_check_branch
      %28 = sbr.rel (0) target = $region29
    $region28: #{tpu_custom_call.1} parent=1 // pred_region
      _
    $region29: #{tpu_custom_call.1} parent=1 // pred_fallthru
      _
    // Predicated region
    $region30: #{tpu_custom_call.1} parent=1 // pred_check
      _
    $region31: #{tpu_custom_call.1} parent=1 // pred_check_branch
      %30 = sbr.rel (0) target = $region33
    $region32: #{tpu_custom_call.1} parent=1 // pred_region
      _
    $region33: #{tpu_custom_call.1} parent=1 // pred_fallthru
      _
    // Predicated region
    $region34: #{tpu_custom_call.1} parent=1 // pred_check
      _
    $region35: #{tpu_custom_call.1} parent=1 // pred_check_branch
      %32 = sbr.rel (0) target = $region37
    $region36: #{tpu_custom_call.1} parent=1 // pred_region
      _
    $region37: #{tpu_custom_call.1} parent=1 // pred_fallthru
      _
    %v34 = vld [vmem:[%s0] sm:$0xff]
    %v35 = vpack.c.bf16 %v34, %v34
    %v36 = vld [vmem:[%s1] sm:$0xf]
    %v37 = vld [vmem:[%s1 + $0x4] sm:$0xf]
    %v38 = vld [vmem:[%s1 + $0x8] sm:$0xf]
    %v39 = vld [vmem:[%s1 + $0xc] sm:$0xf]
    %v40 = vld [vmem:[%s1 + $0x10] sm:$0xf]
    %v41 = vld [vmem:[%s1 + $0x14] sm:$0xf]
    %v42 = vld [vmem:[%s1 + $0x18] sm:$0xf]
    %v43 = vld [vmem:[%s1 + $0x1c] sm:$0xf]
    %v44 = vld [vmem:[%s1 + $0x20] sm:$0xf]
    %v45 = vld [vmem:[%s1 + $0x24] sm:$0xf]
    %v46 = vld [vmem:[%s1 + $0x28] sm:$0xf]
    %v47 = vld [vmem:[%s1 + $0x2c] sm:$0xf]
    %v48 = vld [vmem:[%s1 + $0x30] sm:$0xf]
    %v49 = vld [vmem:[%s1 + $0x34] sm:$0xf]
    %v50 = vld [vmem:[%s1 + $0x38] sm:$0xf]
    %v51 = vld [vmem:[%s1 + $0x3c] sm:$0xf]
    %v52 = vld [vmem:[%s2] sm:$0x1]
    %v54 = vlaneseq
    %v55 = vshrl.u32 %v54, 7
    %v56 = vsub.s32 0, %v55
    %v57 = vrot.slane %v52, %v56
    %v75 = vunpack.c.l.b16 %v36
    %v76 = vunpack.c.l.b16 %v37
    %v77 = vunpack.c.l.b16 %v38
    %v78 = vunpack.c.l.b16 %v39
    %v79 = vunpack.c.l.b16 %v40
    %v80 = vunpack.c.l.b16 %v41
    %v81 = vunpack.c.l.b16 %v42
    %v82 = vunpack.c.l.b16 %v43
    %v83 = vunpack.c.l.b16 %v44
    %v84 = vunpack.c.l.b16 %v45
    %v85 = vunpack.c.l.b16 %v46
    %v86 = vunpack.c.l.b16 %v47
    %v87 = vunpack.c.l.b16 %v48
    %v88 = vunpack.c.l.b16 %v49
    %v89 = vunpack.c.l.b16 %v50
    %v90 = vunpack.c.l.b16 %v51
    %v91 = vpack.c.b16 %v76, %v75
    %v92 = vpack.c.b16 %v78, %v77
    %v93 = vpack.c.b16 %v80, %v79
    %v94 = vpack.c.b16 %v82, %v81
    %v95 = vpack.c.b16 %v84, %v83
    %v96 = vpack.c.b16 %v86, %v85
    %v97 = vpack.c.b16 %v88, %v87
    %v98 = vpack.c.b16 %v90, %v89
    %107 = vmatprep.subr.bf16.mxu0 0
    %108 = vmatpush1.bf16.msra.mxu0 %v98
    %109 = vmatprep.subr.bf16.mxu0 0
    %110 = vmatpush1.bf16.msra.mxu0 %v97
    %111 = vmatprep.subr.bf16.mxu0 0
    %112 = vmatpush1.bf16.msra.mxu0 %v96
    %113 = vmatprep.subr.bf16.mxu0 0
    %114 = vmatpush1.bf16.msra.mxu0 %v95
    %115 = vmatprep.subr.bf16.mxu0 0
    %116 = vmatpush1.bf16.msra.mxu0 %v94
    %117 = vmatprep.subr.bf16.mxu0 0
    %118 = vmatpush1.bf16.msra.mxu0 %v93
    %119 = vmatprep.subr.bf16.mxu0 0
    %120 = vmatpush1.bf16.msra.mxu0 %v92
    %121 = vmatprep.subr.bf16.mxu0 0
    %122 = vmatpush1.bf16.msra.mxu0 %v91
    %123 = vmatprep.subr.bf16.mxu0 0
    %124 = vmatpush2.bf16.msra.mxu0 0
    %125 = vmatprep.subr.bf16.mxu0 0
    %126 = vmatpush2.bf16.msra.mxu0 0
    %127 = vmatprep.subr.bf16.mxu0 0
    %128 = vmatpush2.bf16.msra.mxu0 0
    %129 = vmatprep.subr.bf16.mxu0 0
    %130 = vmatpush2.bf16.msra.mxu0 0
    %131 = vmatprep.subr.bf16.mxu0 0
    %132 = vmatpush2.bf16.msra.mxu0 0
    %133 = vmatprep.subr.bf16.mxu0 0
    %134 = vmatpush2.bf16.msra.mxu0 0
    %135 = vmatprep.subr.bf16.mxu0 0
    %136 = vmatpush2.bf16.msra.mxu0 0
    %137 = vmatprep.subr.bf16.mxu0 0
    %138 = vmatpush2.bf16.msra.mxu0 0
    %139 = vmatprep.mubr.bf16.mxu0 0
    %140 = vmatmul.mubr.bf16.gmra.mxu0 %v35
    %v141 = vpop.f32.mrf.mxu0
    %v142 = vadd.f32 %v57, %v141
    %v143 = vpop.f32.mrf.mxu0
    %v144 = vpop.f32.mrf.mxu0
    %v145 = vpop.f32.mrf.mxu0
    %146 = vdwg.mxu0
    %v147 = vmax.f32 %v142, 0.0
    %v148 = vpack.c.bf16 %v147, %v147
    %v149 = vld [vmem:[%s3] sm:$0xf]
    %v150 = vld [vmem:[%s3 + $0x4] sm:$0xf]
    %v151 = vld [vmem:[%s3 + $0x8] sm:$0xf]
    %v152 = vld [vmem:[%s3 + $0xc] sm:$0xf]
    %v153 = vld [vmem:[%s3 + $0x10] sm:$0xf]
    %v154 = vld [vmem:[%s3 + $0x14] sm:$0xf]
    %v155 = vld [vmem:[%s3 + $0x18] sm:$0xf]
    %v156 = vld [vmem:[%s3 + $0x1c] sm:$0xf]
    %v157 = vld [vmem:[%s4] sm:$0x1]
    %v159 = vlaneseq
    %v160 = vshrl.u32 %v159, 7
    %v161 = vsub.s32 0, %v160
    %v162 = vrot.slane %v157, %v161
    %v172 = vunpack.c.l.b16 %v149
    %v173 = vunpack.c.l.b16 %v150
    %v174 = vunpack.c.l.b16 %v151
    %v175 = vunpack.c.l.b16 %v152
    %v176 = vunpack.c.l.b16 %v153
    %v177 = vunpack.c.l.b16 %v154
    %v178 = vunpack.c.l.b16 %v155
    %v179 = vunpack.c.l.b16 %v156
    %v180 = vpack.c.b16 %v173, %v172
    %v181 = vpack.c.b16 %v175, %v174
    %v182 = vpack.c.b16 %v177, %v176
    %v183 = vpack.c.b16 %v179, %v178
    %vm188 = vcmask 523264
    %v190 = vsel %vm188, %v148, 0
    %192 = vmatprep.subr.bf16.mxu0 0
    %193 = vmatpush1.bf16.msra.mxu0 0
    %194 = vmatprep.subr.bf16.mxu0 0
    %195 = vmatpush1.bf16.msra.mxu0 0
    %196 = vmatprep.subr.bf16.mxu0 0
    %197 = vmatpush1.bf16.msra.mxu0 0
    %198 = vmatprep.subr.bf16.mxu0 0
    %199 = vmatpush1.bf16.msra.mxu0 0
    %200 = vmatprep.subr.bf16.mxu0 0
    %201 = vmatpush1.bf16.msra.mxu0 %v183
    %202 = vmatprep.subr.bf16.mxu0 0
    %203 = vmatpush1.bf16.msra.mxu0 %v182
    %204 = vmatprep.subr.bf16.mxu0 0
    %205 = vmatpush1.bf16.msra.mxu0 %v181
    %206 = vmatprep.subr.bf16.mxu0 0
    %207 = vmatpush1.bf16.msra.mxu0 %v180
    %208 = vmatprep.subr.bf16.mxu0 0
    %209 = vmatpush2.bf16.msra.mxu0 0
    %210 = vmatprep.subr.bf16.mxu0 0
    %211 = vmatpush2.bf16.msra.mxu0 0
    %212 = vmatprep.subr.bf16.mxu0 0
    %213 = vmatpush2.bf16.msra.mxu0 0
    %214 = vmatprep.subr.bf16.mxu0 0
    %215 = vmatpush2.bf16.msra.mxu0 0
    %216 = vmatprep.subr.bf16.mxu0 0
    %217 = vmatpush2.bf16.msra.mxu0 0
    %218 = vmatprep.subr.bf16.mxu0 0
    %219 = vmatpush2.bf16.msra.mxu0 0
    %220 = vmatprep.subr.bf16.mxu0 0
    %221 = vmatpush2.bf16.msra.mxu0 0
    %222 = vmatprep.subr.bf16.mxu0 0
    %223 = vmatpush2.bf16.msra.mxu0 0
    %224 = vmatprep.mubr.bf16.mxu0 0
    %225 = vmatmul.mubr.bf16.gmra.mxu0 %v190
    %v226 = vpop.f32.mrf.mxu0
    %v227 = vadd.f32 %v162, %v226
    %v228 = vpop.f32.mrf.mxu0
    %v229 = vpop.f32.mrf.mxu0
    %v230 = vpop.f32.mrf.mxu0
    %231 = vdwg.mxu0
    %v232 = vmax.f32 %v227, 0.0
    %v233 = vpack.c.bf16 %v232, %v232
    %v234 = vld [vmem:[%s5] sm:$0xf]
    %v235 = vld [vmem:[%s5 + $0x4] sm:$0xf]
    %v236 = vld [vmem:[%s5 + $0x8] sm:$0xf]
    %v237 = vld [vmem:[%s5 + $0xc] sm:$0xf]
    %v238 = vld [vmem:[%s6] sm:$0x1]
    %v240 = vlaneseq
    %v241 = vshrl.u32 %v240, 7
    %v242 = vsub.s32 0, %v241
    %v243 = vrot.slane %v238, %v242
    %v249 = vunpack.c.l.b16 %v234
    %v250 = vunpack.c.l.b16 %v235
    %v251 = vunpack.c.l.b16 %v236
    %v252 = vunpack.c.l.b16 %v237
    %v253 = vpack.c.b16 %v250, %v249
    %v254 = vpack.c.b16 %v252, %v251
    %vm257 = vcmask 261120
    %v259 = vsel %vm257, %v233, 0
    %261 = vmatprep.subr.bf16.mxu0 0
    %262 = vmatpush1.bf16.msra.mxu0 0
    %263 = vmatprep.subr.bf16.mxu0 0
    %264 = vmatpush1.bf16.msra.mxu0 0
    %265 = vmatprep.subr.bf16.mxu0 0
    %266 = vmatpush1.bf16.msra.mxu0 0
    %267 = vmatprep.subr.bf16.mxu0 0
    %268 = vmatpush1.bf16.msra.mxu0 0
    %269 = vmatprep.subr.bf16.mxu0 0
    %270 = vmatpush1.bf16.msra.mxu0 0
    %271 = vmatprep.subr.bf16.mxu0 0
    %272 = vmatpush1.bf16.msra.mxu0 0
    %273 = vmatprep.subr.bf16.mxu0 0
    %274 = vmatpush1.bf16.msra.mxu0 %v254
    %275 = vmatprep.subr.bf16.mxu0 0
    %276 = vmatpush1.bf16.msra.mxu0 %v253
    %277 = vmatprep.subr.bf16.mxu0 0
    %278 = vmatpush2.bf16.msra.mxu0 0
    %279 = vmatprep.subr.bf16.mxu0 0
    %280 = vmatpush2.bf16.msra.mxu0 0
    %281 = vmatprep.subr.bf16.mxu0 0
    %282 = vmatpush2.bf16.msra.mxu0 0
    %283 = vmatprep.subr.bf16.mxu0 0
    %284 = vmatpush2.bf16.msra.mxu0 0
    %285 = vmatprep.subr.bf16.mxu0 0
    %286 = vmatpush2.bf16.msra.mxu0 0
    %287 = vmatprep.subr.bf16.mxu0 0
    %288 = vmatpush2.bf16.msra.mxu0 0
    %289 = vmatprep.subr.bf16.mxu0 0
    %290 = vmatpush2.bf16.msra.mxu0 0
    %291 = vmatprep.subr.bf16.mxu0 0
    %292 = vmatpush2.bf16.msra.mxu0 0
    %293 = vmatprep.mubr.bf16.mxu0 0
    %294 = vmatmul.mubr.bf16.gmra.mxu0 %v259
    %v295 = vpop.f32.mrf.mxu0
    %v296 = vadd.f32 %v243, %v295
    %v297 = vpop.f32.mrf.mxu0
    %v298 = vpop.f32.mrf.mxu0
    %v299 = vpop.f32.mrf.mxu0
    %300 = vdwg.mxu0
    %v301 = vmax.f32 %v296, 0.0
    %v302 = vpack.c.bf16 %v301, %v301
    %v303 = vld [vmem:[%s7] sm:$0xf]
    %v304 = vld [vmem:[%s7 + $0x4] sm:$0xf]
    %v305 = vld [vmem:[%s8] sm:$0x1]
    %v307 = vlaneseq
    %v308 = vshrl.u32 %v307, 7
    %v309 = vsub.s32 0, %v308
    %v310 = vrot.slane %v305, %v309
    %v314 = vunpack.c.l.b16 %v303
    %v315 = vunpack.c.l.b16 %v304
    %v316 = vpack.c.b16 %v315, %v314
    %vm318 = vcmask 130048
    %v320 = vsel %vm318, %v302, 0
    %322 = vmatprep.subr.bf16.mxu0 0
    %323 = vmatpush1.bf16.msra.mxu0 0
    %324 = vmatprep.subr.bf16.mxu0 0
    %325 = vmatpush1.bf16.msra.mxu0 0
    %326 = vmatprep.subr.bf16.mxu0 0
    %327 = vmatpush1.bf16.msra.mxu0 0
    %328 = vmatprep.subr.bf16.mxu0 0
    %329 = vmatpush1.bf16.msra.mxu0 0
    %330 = vmatprep.subr.bf16.mxu0 0
    %331 = vmatpush1.bf16.msra.mxu0 0
    %332 = vmatprep.subr.bf16.mxu0 0
    %333 = vmatpush1.bf16.msra.mxu0 0
    %334 = vmatprep.subr.bf16.mxu0 0
    %335 = vmatpush1.bf16.msra.mxu0 0
    %336 = vmatprep.subr.bf16.mxu0 0
    %337 = vmatpush1.bf16.msra.mxu0 %v316
    %338 = vmatprep.subr.bf16.mxu0 0
    %339 = vmatpush2.bf16.msra.mxu0 0
    %340 = vmatprep.subr.bf16.mxu0 0
    %341 = vmatpush2.bf16.msra.mxu0 0
    %342 = vmatprep.subr.bf16.mxu0 0
    %343 = vmatpush2.bf16.msra.mxu0 0
    %344 = vmatprep.subr.bf16.mxu0 0
    %345 = vmatpush2.bf16.msra.mxu0 0
    %346 = vmatprep.subr.bf16.mxu0 0
    %347 = vmatpush2.bf16.msra.mxu0 0
    %348 = vmatprep.subr.bf16.mxu0 0
    %349 = vmatpush2.bf16.msra.mxu0 0
    %350 = vmatprep.subr.bf16.mxu0 0
    %351 = vmatpush2.bf16.msra.mxu0 0
    %352 = vmatprep.subr.bf16.mxu0 0
    %353 = vmatpush2.bf16.msra.mxu0 0
    %354 = vmatprep.mubr.bf16.mxu0 0
    %355 = vmatmul.mubr.bf16.gmra.mxu0 %v320
    %v356 = vpop.f32.mrf.mxu0
    %v357 = vadd.f32 %v310, %v356
    %v358 = vpop.f32.mrf.mxu0
    %v359 = vpop.f32.mrf.mxu0
    %v360 = vpop.f32.mrf.mxu0
    %361 = vdwg.mxu0
    %v362 = vmul.f32 %v357, 0.5
    %v363 = vtanh.pop %v362
    %v364 = vmul.f32 %v363, 0.5
    %vm365 = vcmask 80896
    %366 = vst.msk [vmem:[#allocation2] sm:$0xff] %vm365, %v364
    // Predicated region
    $region38: #{tpu_custom_call.1} parent=1 // pred_check
      _
    $region39: #{tpu_custom_call.1} parent=1 // pred_check_branch
      %368 = sbr.rel (0) target = $region41
    $region40: #{tpu_custom_call.1} parent=1 // pred_region
      %s370 = ssub.s32 128, 128
      %371 = vsyncadd [#allocation3], %s370
      %s373 = sshll.u32 [#allocation2], 4
      %s374 = int_to_ptr.vmem [resolvable:$true] %s373
      %376 = dma.vmem_to_hbm [thread:$0]  %s374, 128, %s9, [#allocation3]
    $region41: #{tpu_custom_call.1} parent=1 // pred_fallthru
      _
    // Predicated region
    $region42: #{tpu_custom_call.1} parent=1 // pred_check
      _
    $region43: #{tpu_custom_call.1} parent=1 // pred_check_branch
      %378 = sbr.rel (0) target = $region45
    $region44: #{tpu_custom_call.1} parent=1 // pred_region
      %379 = dma.done [#allocation3], 128
    $region45: #{tpu_custom_call.1} parent=1 // pred_fallthru
      _
    %380 = vsyncpa [#allocation3], 1

</llo_original>
